<compile_context>
chip_gen: v5e
topology: v5e:2x2
jax: 0.10.0
libtpu: 0.0.40
codegen_flags: <defaults>
</compile_context>

<pallas_src>
import functools
import numpy as np

import jax
import jax.numpy as jnp
from jax import lax
from jax.experimental import pallas as pl
from jax.experimental.pallas import tpu as pltpu


# ----------------------------------------------------------------------------
# numpy flow visualization (verbatim port of the reference helpers; host-side
# data-dependent python loops -> no Pallas).
# ----------------------------------------------------------------------------
def make_color_wheel():
    RY, YG, GC, CB, BM, MR = (15, 6, 4, 11, 13, 6)
    ncols = RY + YG + GC + CB + BM + MR
    colorwheel = np.zeros([ncols, 3])
    col = 0
    colorwheel[0:RY, 0] = 255
    colorwheel[0:RY, 1] = np.transpose(np.floor(255 * np.arange(0, RY) / RY))
    col += RY
    colorwheel[col:col + YG, 0] = 255 - np.transpose(np.floor(255 * np.arange(0, YG) / YG))
    colorwheel[col:col + YG, 1] = 255
    col += YG
    colorwheel[col:col + GC, 1] = 255
    colorwheel[col:col + GC, 2] = np.transpose(np.floor(255 * np.arange(0, GC) / GC))
    col += GC
    colorwheel[col:col + CB, 1] = 255 - np.transpose(np.floor(255 * np.arange(0, CB) / CB))
    colorwheel[col:col + CB, 2] = 255
    col += CB
    colorwheel[col:col + BM, 2] = 255
    colorwheel[col:col + BM, 0] = np.transpose(np.floor(255 * np.arange(0, BM) / BM))
    col += +BM
    colorwheel[col:col + MR, 2] = 255 - np.transpose(np.floor(255 * np.arange(0, MR) / MR))
    colorwheel[col:col + MR, 0] = 255
    return colorwheel


def compute_color(u, v):
    h, w = u.shape
    img = np.zeros([h, w, 3])
    nanIdx = np.isnan(u) | np.isnan(v)
    u[nanIdx] = 0
    v[nanIdx] = 0
    colorwheel = make_color_wheel()
    ncols = np.size(colorwheel, 0)
    rad = np.sqrt(u ** 2 + v ** 2)
    a = np.arctan2(-v, -u) / np.pi
    fk = (a + 1) / 2 * (ncols - 1) + 1
    k0 = np.floor(fk).astype(int)
    k1 = k0 + 1
    k1[k1 == ncols + 1] = 1
    f = fk - k0
    for i in range(np.size(colorwheel, 1)):
        tmp = colorwheel[:, i]
        col0 = tmp[k0 - 1] / 255
        col1 = tmp[k1 - 1] / 255
        col = (1 - f) * col0 + f * col1
        idx = rad <= 1
        col[idx] = 1 - rad[idx] * (1 - col[idx])
        notidx = np.logical_not(idx)
        col[notidx] *= 0.75
        img[:, :, i] = np.uint8(np.floor(255 * col * (1 - nanIdx)))
    return img


def flow_to_image(flow):
    out = []
    maxu = -999.0
    maxv = -999.0
    minu = 999.0
    minv = 999.0
    maxrad = -1
    for i in range(flow.shape[0]):
        u = flow[i, :, :, 0]
        v = flow[i, :, :, 1]
        idxunknow = (abs(u) > 10000000.0) | (abs(v) > 10000000.0)
        u[idxunknow] = 0
        v[idxunknow] = 0
        maxu = max(maxu, np.max(u))
        minu = min(minu, np.min(u))
        maxv = max(maxv, np.max(v))
        minv = min(minv, np.min(v))
        rad = np.sqrt(u ** 2 + v ** 2)
        maxrad = max(maxrad, np.max(rad))
        u = u / (maxrad + np.finfo(float).eps)
        v = v / (maxrad + np.finfo(float).eps)
        img = compute_color(u, v)
        out.append(img)
    return np.float32(np.uint8(out))


# ----------------------------------------------------------------------------
# JAX glue: same padding, patch extraction (unfold), col2im (fold).
# ----------------------------------------------------------------------------
def _round_up(x, m):
    return ((x + m - 1) // m) * m


def _pad_last2(a, rows, cols):
    pr = rows - a.shape[-2]
    pc = cols - a.shape[-1]
    if pr == 0 and pc == 0:
        return a
    cfg = [(0, 0)] * (a.ndim - 2) + [(0, pr), (0, pc)]
    return jnp.pad(a, cfg)


def _same_pad_2d(x, ksizes, strides):
    """x: (..., H, W). Same-padding exactly like the PyTorch same_padding()."""
    H, W = x.shape[-2], x.shape[-1]
    out_h = (H + strides[0] - 1) // strides[0]
    out_w = (W + strides[1] - 1) // strides[1]
    pad_h = max(0, (out_h - 1) * strides[0] + ksizes[0] - H)
    pad_w = max(0, (out_w - 1) * strides[1] + ksizes[1] - W)
    top = pad_h // 2
    bottom = pad_h - top
    left = pad_w // 2
    right = pad_w - left
    cfg = [(0, 0)] * (x.ndim - 2) + [(top, bottom), (left, right)]
    return jnp.pad(x, cfg)


def _extract_patches(img, k, stride):
    """img: (C, Hp, Wp) already padded.

    Returns (L, C*k*k) with the patch flattened c-major, then ky, then kx
    (identical ordering to torch.nn.Unfold followed by view/permute).
    """
    C, Hp, Wp = img.shape
    out_h = (Hp - k) // stride + 1
    out_w = (Wp - k) // stride + 1
    cols = []
    for ky in range(k):
        for kx in range(k):
            cols.append(
                lax.slice(img, (0, ky, kx),
                          (C, ky + stride * (out_h - 1) + 1,
                           kx + stride * (out_w - 1) + 1),
                          (1, stride, stride)))
    p = jnp.stack(cols, axis=0)                       # (k*k, C, out_h, out_w)
    p = p.reshape(k, k, C, out_h * out_w)
    p = jnp.transpose(p, (3, 2, 0, 1))                # (L, C, k, k)
    return p.reshape(out_h * out_w, C * k * k), out_h, out_w


def _col2im_add(cols, k, stride, padding, out_h, out_w):
    """cols: (Hin, Win, C, k, k) -> conv_transpose2d-style overlap-add fold."""
    Hin, Win, C = cols.shape[0], cols.shape[1], cols.shape[2]
    full_h = (Hin - 1) * stride + k
    full_w = (Win - 1) * stride + k
    out_full = jnp.zeros((C, full_h, full_w), cols.dtype)
    for ky in range(k):
        for kx in range(k):
            out_full = out_full.at[:, ky:ky + stride * (Hin - 1) + 1:stride,
                                      kx:kx + stride * (Win - 1) + 1:stride].add(
                jnp.transpose(cols[:, :, :, ky, kx], (2, 0, 1)))
    return out_full[:, padding:padding + out_h, padding:padding + out_w]


# ----------------------------------------------------------------------------
# Pallas kernel: per-(batch, Nf-tile) contextual attention hot path.
# All heavy operands arrive pre-prepped in bf16 (normalization, softmax scale,
# 1/4 deconv factor folded in at the wrapper).
# ----------------------------------------------------------------------------
def _ca_kernel(x_ref, wt_ref, raww_ref, mm_ref, y_ref, off_ref, *,
               l_valid, has_mask):
    x = x_ref[0]                      # (tile_nf, K2C_pad) bf16
    wt = wt_ref[0]                    # (K2C_pad, L_pad)   bf16, normalized*scale

    # GEMM 1 (MXU, f32 accumulation): scaled matching scores.
    s = lax.dot_general(x, wt, (((1,), (0,)), ((), ())),
                        preferred_element_type=jnp.float32)    # (tile_nf, L_pad)

    # Row-vector masks (broadcast over the tile; no full-tile int32/bool temps).
    lane = lax.broadcasted_iota(jnp.int32, (1, s.shape[1]), 1)
    col_valid = lane < l_valid                                 # excludes L padding
    if has_mask:
        mmrow = mm_ref[0]                                      # (1, L_pad) f32 {0,1}
        keep = (mmrow > 0.0) & col_valid
        s_in = s * mmrow              # reference semantics: masked cols carry 0
    else:
        keep = col_valid
        s_in = s

    neg_big = jnp.float32(-1e30)
    s_arg = jnp.where(keep, s, neg_big)
    m_arg = jnp.max(s_arg, axis=1, keepdims=True)
    # Stabilizer >= every softmax input (masked-but-real columns hold 0); the
    # softmax result is invariant to the subtracted constant.
    c = jnp.maximum(m_arg, 0.0)
    e = jnp.where(col_valid, jnp.exp(s_in - c), 0.0)           # padded cols excluded
    denom = jnp.sum(e, axis=1, keepdims=True)
    p = e * pl.reciprocal(denom, approx=True)
    if has_mask:
        p = p * mmrow

    # Fused argmax over valid, unmasked columns (first index on ties, matching
    # torch.argmax over the masked softmax output).
    off = jnp.min(jnp.where(s_arg >= m_arg, lane, jnp.int32(s.shape[1])),
                  axis=1, keepdims=True)                       # (tile_nf, 1) i32

    # GEMM 2 (MXU, f32 accumulation): deconv columns; 0.25 folded into raww.
    yc = lax.dot_general(p.astype(jnp.bfloat16), raww_ref[0],
                         (((1,), (0,)), ((), ())),
                         preferred_element_type=jnp.float32)   # (tile_nf, C16_pad)

    y_ref[0] = yc.astype(y_ref.dtype)                          # bf16 writeback
    off_ref[0] = jnp.broadcast_to(off, (off.shape[0], off_ref.shape[2]))


def _vmem_capacity_bytes():
    try:
        return int(pltpu.get_tpu_info().vmem_capacity_bytes)
    except Exception:
        return 64 * 1024 * 1024       # conservative default (v7x per-TC VMEM)


def _pick_tile_nf(nf, l_pad, vmem_cap):
    """Nf-tile: multiples of 256 preferred, VMEM/L-aware, minimal tail waste."""
    if nf <= 512:
        return _round_up(nf, 16)
    cands = [t for t in (1024, 512, 256) if 5 * t * l_pad * 4 <= vmem_cap // 3]
    if not cands:
        return 256
    for t in cands:
        if nf % t == 0:
            return t
    return min(cands, key=lambda t: ((-nf) % t, -t))


def _contextual_attention_core(x_bf16, wt_bf16, raww_bf16, mm, l_valid,
                               tile_nf, has_mask):
    B, Nf_pad, K2C_pad = x_bf16.shape
    L_pad = wt_bf16.shape[2]
    C16_pad = raww_bf16.shape[2]
    n_tiles = Nf_pad // tile_nf

    kernel = functools.partial(_ca_kernel, l_valid=int(l_valid),
                               has_mask=bool(has_mask))

    flops = 2 * B * Nf_pad * L_pad * (K2C_pad + C16_pad)
    transcendentals = B * Nf_pad * L_pad
    bytes_accessed = (2 * (x_bf16.size + B * Nf_pad * C16_pad)
                      + 2 * (wt_bf16.size + raww_bf16.size)
                      + 4 * (mm.size + B * Nf_pad * 8))

    # VMEM: double-buffered bf16 streamed tiles + per-batch resident bf16
    # W/RAW_W (2 buffers each under default pipelining) + f32 score/softmax
    # temporaries.  Cap at 3/4 of physical VMEM (48 MiB on v7x, 96 MiB v5e/v6e).
    vmem_need = (2 * tile_nf * K2C_pad * 2          # x (bf16, 2 buffers)
                 + 2 * K2C_pad * L_pad * 2          # wn^T (bf16, 2 buffers)
                 + 2 * L_pad * C16_pad * 2          # raw_w (bf16, 2 buffers)
                 + 2 * L_pad * 4                    # mm
                 + 2 * tile_nf * C16_pad * 2        # y out (bf16, 2 buffers)
                 + 2 * tile_nf * 128 * 4            # offsets out (lane-padded)
                 + 5 * tile_nf * L_pad * 4)         # f32 temporaries
    vmem_cap = _vmem_capacity_bytes()
    vmem_limit = int(min(max(int(vmem_need * 1.4), 32 * 1024 * 1024),
                         (vmem_cap * 3) // 4))

    ycols, offsets = pl.pallas_call(
        kernel,
        out_shape=(jax.ShapeDtypeStruct((B, Nf_pad, C16_pad), jnp.bfloat16),
                   jax.ShapeDtypeStruct((B, Nf_pad, 8), jnp.int32)),
        grid=(B, n_tiles),
        in_specs=[
            # TODO(synk): at small L, pipeline_mode=pl.Buffered(3) on x hides the
            # per-tile DMA, and pl.Buffered(1) on the three per-batch operands
            # halves their resident VMEM (matters on v7x at large L).
            pl.BlockSpec((1, tile_nf, K2C_pad), lambda b, n: (b, n, 0)),
            pl.BlockSpec((1, K2C_pad, L_pad), lambda b, n: (b, 0, 0)),
            pl.BlockSpec((1, L_pad, C16_pad), lambda b, n: (b, 0, 0)),
            pl.BlockSpec((1, 1, L_pad), lambda b, n: (b, 0, 0)),
        ],
        out_specs=(pl.BlockSpec((1, tile_nf, C16_pad), lambda b, n: (b, n, 0)),
                   pl.BlockSpec((1, tile_nf, 8), lambda b, n: (b, n, 0))),
        compiler_params=pltpu.CompilerParams(
            dimension_semantics=("parallel", "parallel"),
            vmem_limit_bytes=vmem_limit),
        cost_estimate=pl.CostEstimate(flops=int(flops),
                                      transcendentals=int(transcendentals),
                                      bytes_accessed=int(bytes_accessed)),
    )(x_bf16, wt_bf16, raww_bf16, mm)
    return ycols, offsets


def _reference_core(x_bf16, wt_bf16, raww_bf16, mm, l_valid, has_mask):
    """Pure-jnp replica of the Pallas core on the same prepped operands."""
    s = jnp.einsum('bnk,bkl->bnl', x_bf16, wt_bf16,
                   preferred_element_type=jnp.float32)
    lane = jnp.arange(s.shape[-1])[None, None, :]
    col_valid = lane < l_valid
    if has_mask:
        keep = (mm > 0.0) & col_valid
        s_in = s * mm
    else:
        keep = col_valid
        s_in = s
    s_arg = jnp.where(keep, s, jnp.float32(-1e30))
    c = jnp.maximum(jnp.max(s_arg, axis=-1, keepdims=True), 0.0)
    e = jnp.where(col_valid, jnp.exp(s_in - c), 0.0)
    p = e / jnp.sum(e, axis=-1, keepdims=True)
    if has_mask:
        p = p * mm
    yc = jnp.einsum('bnl,blc->bnc', p.astype(jnp.bfloat16), raww_bf16,
                    preferred_element_type=jnp.float32)
    return yc


# ----------------------------------------------------------------------------
# Module wrapper reproducing ContextualAttention.forward
# ----------------------------------------------------------------------------
class ContextualAttentionPallas:
    def __init__(self, ksize=3, stride=1, rate=2, fuse_k=3, softmax_scale=10,
                 fuse=False, check=False, return_flow=True):
        self.ksize = ksize
        self.stride = stride
        self.rate = rate
        self.fuse_k = fuse_k
        self.softmax_scale = softmax_scale
        self.fuse = fuse
        self.check = check
        self.return_flow = return_flow

    def __call__(self, f, b, mask=None):
        if self.fuse:
            # TODO(synk): fuse=True identity-kernel refinement path not implemented
            # (module default is fuse=False).
            raise NotImplementedError("fuse=True path not implemented")

        B, C, Hf, Wf = f.shape
        rate, ksize, stride = self.rate, self.ksize, self.stride
        kernel = 2 * rate
        rs = rate * stride

        # raw (2*rate)x(2*rate) patches from full-res background  (vmapped unfold)
        raww_mat = jax.vmap(
            lambda im: _extract_patches(
                _same_pad_2d(im, [kernel, kernel], [rs, rs]), kernel, rs)[0])(b)

        # nearest downsampling by 1/rate (PyTorch nearest: idx = i*rate)
        f_ds = f[:, :, ::rate, ::rate]
        b_ds = b[:, :, ::rate, ::rate]
        Hf2, Wf2 = f_ds.shape[-2], f_ds.shape[-1]
        Hb2, Wb2 = b_ds.shape[-2], b_ds.shape[-1]
        Nf = Hf2 * Wf2

        # ksize x ksize patches of downsampled background + foreground
        w_mat = jax.vmap(
            lambda im: _extract_patches(
                _same_pad_2d(im, [ksize, ksize], [stride, stride]), ksize, stride)[0])(b_ds)
        # TODO(synk): x_mat materializes each f_ds pixel ksize*ksize times in HBM;
        # for large inputs stream f_ds tiles and form the shifted views in-kernel.
        x_mat = jax.vmap(
            lambda im: _extract_patches(
                _same_pad_2d(im, [ksize, ksize], [1, 1]), ksize, 1)[0])(f_ds)
        L = w_mat.shape[1]

        # mask -> mm (valid patch indicator), shared across the batch (m = m[0])
        has_mask = mask is not None
        if has_mask:
            m_ds = mask[:, :, ::(4 * rate), ::(4 * rate)]
            mp = _same_pad_2d(m_ds[0], [ksize, ksize], [stride, stride])
            mmat, _, _ = _extract_patches(mp, ksize, stride)
            mm = (jnp.mean(mmat, axis=1) == 0.0).astype(jnp.float32).reshape(1, 1, -1)
        else:
            mm = jnp.ones((1, 1, L), jnp.float32)
        mm = jnp.broadcast_to(mm, (B, 1, L))

        # escape_NaN (1e-4) is added elementwise before the sum in the reference:
        # sqrt(sum(w^2 + 1e-4)) == sqrt(sum(w^2) + C*k*k*1e-4)
        eps_sum = C * ksize * ksize * 1e-4
        K2C = C * ksize * ksize
        C16 = C * kernel * kernel

        # lane/sublane-aligned padding (zeros; padded L columns are excluded
        # from softmax/argmax inside the kernel)
        K2C_pad = _round_up(K2C, 128)
        C16_pad = _round_up(C16, 128)
        L_pad = _round_up(L, 128)
        vmem_cap = _vmem_capacity_bytes()
        tile_nf = _pick_tile_nf(Nf, L_pad, vmem_cap)
        Nf_pad = _round_up(Nf, tile_nf)

        # Wrapper-side bf16 prep: W rsqrt-normalized with softmax_scale folded in
        # and transposed to (K2C, L) so GEMM1 is a plain (M,K)x(K,N); RAW_W with
        # the 1/4 deconv factor folded in; x streamed in bf16.
        inv = lax.rsqrt(jnp.sum(w_mat * w_mat, axis=2, keepdims=True) + eps_sum)
        wt = jnp.swapaxes(w_mat * (inv * float(self.softmax_scale)), 1, 2)
        wt_p = _pad_last2(wt, K2C_pad, L_pad).astype(jnp.bfloat16)
        raww_p = _pad_last2(raww_mat * 0.25, L_pad, C16_pad).astype(jnp.bfloat16)
        x_p = _pad_last2(x_mat, Nf_pad, K2C_pad).astype(jnp.bfloat16)
        mm_p = _pad_last2(mm, 1, L_pad)

        ycols_b16, off_out = _contextual_attention_core(
            x_p, wt_p, raww_p, mm_p, L, tile_nf, has_mask)

        ycols = ycols_b16[:, :Nf, :C16].astype(jnp.float32)        # (B, Nf, C*(2r)^2)
        off_flat = off_out[:, :Nf, 0]                              # (B, Nf) i32

        if self.check:
            ref = _reference_core(x_p, wt_p, raww_p, mm_p, L, has_mask)
            ref_cols = ref[:, :Nf, :C16].astype(jnp.bfloat16).astype(jnp.float32)
            np.testing.assert_allclose(np.asarray(ycols), np.asarray(ref_cols),
                                       rtol=5e-2, atol=5e-2)

        # fold (col2im): conv_transpose2d(stride=rate, padding=1) overlap-add
        out_h = (Hf2 - 1) * rate - 2 + kernel
        out_w = (Wf2 - 1) * rate - 2 + kernel
        cols = ycols.reshape(B, Hf2, Wf2, C, kernel, kernel)
        y = jax.vmap(lambda cb: _col2im_add(cb, kernel, rate, 1, out_h, out_w))(cols)

        if not self.return_flow:
            # keep the host flow round-trip off the hot path entirely
            return y, None

        # offsets -> flow visualization (host-side numpy, like the reference)
        off = off_flat.reshape(B, 1, Hf2, Wf2)
        if (Hb2, Wb2) != (Hf2, Wf2):
            times = float(Hf2 * Wf2) / float(Hb2 * Wb2)
            off = ((off + 1).astype(jnp.float32) * times - 1).astype(jnp.int32)
        off = jnp.concatenate([off // Wf2, off % Wf2], axis=1)      # (B,2,Hf2,Wf2)
        h_add = jnp.broadcast_to(jnp.arange(Hf2).reshape(1, 1, Hf2, 1),
                                 (B, 1, Hf2, Wf2))
        w_add = jnp.broadcast_to(jnp.arange(Wf2).reshape(1, 1, 1, Wf2),
                                 (B, 1, Hf2, Wf2))
        off = off - jnp.concatenate([h_add, w_add], axis=1)

        off_np = np.array(jax.device_get(jnp.transpose(off, (0, 2, 3, 1))),
                          dtype=np.int64)
        flow_np = flow_to_image(off_np) / 255.0
        flow = jnp.transpose(jnp.asarray(flow_np, jnp.float32), (0, 3, 1, 2))
        if rate != 1:
            flow = jnp.repeat(jnp.repeat(flow, rate * 4, axis=2), rate * 4, axis=3)
        return y, flow


if __name__ == "__main__":
    key = jax.random.PRNGKey(0)
    kf, kb = jax.random.split(key)
    B, C, H, W = 2, 4, 16, 16
    f = jax.random.normal(kf, (B, C, H, W), jnp.float32)
    b = jax.random.normal(kb, (B, C, H, W), jnp.float32)

    ca = ContextualAttentionPallas(ksize=3, stride=1, rate=2, fuse_k=3,
                                   softmax_scale=10.0, fuse=False, check=True)
    y, flow = ca(f, b, mask=None)
    y = jax.block_until_ready(y)
    flow = jax.block_until_ready(flow)

    assert y.shape == (B, C, H, W), y.shape
    assert flow.shape == (B, 3, (H // 2) * 8, (W // 2) * 8), flow.shape
    assert bool(jnp.all(jnp.isfinite(y)))
    print("KERNEL_OK")
</pallas_src>

<mosaic_0001>
module attributes {stable_mosaic.version = 11 : i64} {
  func.func @_ca_kernel(%arg0: i32, %arg1: i32, %arg2: memref<1x64x128xbf16, #tpu.memory_space<vmem>>, %arg3: memref<1x128x128xbf16, #tpu.memory_space<vmem>>, %arg4: memref<1x128x128xbf16, #tpu.memory_space<vmem>>, %arg5: memref<1x1x128xf32, #tpu.memory_space<vmem>>, %arg6: memref<1x64x128xbf16, #tpu.memory_space<vmem>>, %arg7: memref<1x64x8xi32, #tpu.memory_space<vmem>>) attributes {dimension_semantics = [#tpu.dimension_semantics<parallel>, #tpu.dimension_semantics<parallel>], iteration_bounds = array<i64: 2, 1>, scalar_prefetch = 0 : i64, scratch_operands = 0 : i64, tpu.core_type = #tpu.core_type<tc>, window_params = [{transform_indices = @transform_0, window_bounds = array<i64: 1, 64, 128>}, {transform_indices = @transform_1, window_bounds = array<i64: 1, 128, 128>}, {transform_indices = @transform_2, window_bounds = array<i64: 1, 128, 128>}, {transform_indices = @transform_3, window_bounds = array<i64: 1, 1, 128>}, {transform_indices = @transform_4, window_bounds = array<i64: 1, 64, 128>}, {transform_indices = @transform_5, window_bounds = array<i64: 1, 64, 8>}]} {
    %c0 = arith.constant 0 : index
    %c0_0 = arith.constant 0 : index
    %c0_1 = arith.constant 0 : index
    %0 = vector.load %arg2[%c0, %c0_0, %c0_1] : memref<1x64x128xbf16, #tpu.memory_space<vmem>>, vector<1x64x128xbf16>
    %1 = vector.shape_cast %0 : vector<1x64x128xbf16> to vector<64x128xbf16>
    %c0_2 = arith.constant 0 : index
    %c0_3 = arith.constant 0 : index
    %c0_4 = arith.constant 0 : index
    %2 = vector.load %arg3[%c0_2, %c0_3, %c0_4] : memref<1x128x128xbf16, #tpu.memory_space<vmem>>, vector<1x128x128xbf16>
    %3 = vector.shape_cast %2 : vector<1x128x128xbf16> to vector<128x128xbf16>
    %cst = arith.constant dense<0.000000e+00> : vector<64x128xf32>
    %4 = tpu.matmul %1, %3, %cst {dimension_numbers = #tpu.dot_dimension_numbers<[1], [0], [0], [1], [0, 0, 1, 1], [], []>} : vector<64x128xbf16>, vector<128x128xbf16>, vector<64x128xf32> -> vector<64x128xf32>
    %5 = tpu.iota {dimensions = array<i32: 1>} : vector<1x128xi32>
    %c64_i32 = arith.constant 64 : i32
    %6 = vector.broadcast %c64_i32 : i32 to vector<1x128xi32>
    %7 = arith.cmpi slt, %5, %6 : vector<1x128xi32>
    %cst_5 = arith.constant -1.000000e+30 : f32
    %8 = vector.shape_cast %7 : vector<1x128xi1> to vector<1x128xi1>
    %9 = vector.broadcast %8 : vector<1x128xi1> to vector<64x128xi1>
    %10 = vector.broadcast %cst_5 : f32 to vector<64x128xf32>
    %11 = arith.select %9, %4, %10 : vector<64x128xi1>, vector<64x128xf32>
    %cst_6 = arith.constant dense<0xFF800000> : vector<64xf32>
    %12 = vector.multi_reduction <maximumf>, %11, %cst_6 [1] : vector<64x128xf32> to vector<64xf32>
    %13 = vector.shape_cast %12 : vector<64xf32> to vector<64x1xf32>
    %cst_7 = arith.constant 0.000000e+00 : f32
    %14 = vector.broadcast %cst_7 : f32 to vector<64x1xf32>
    %15 = arith.maximumf %13, %14 : vector<64x1xf32>
    %16 = vector.broadcast %15 : vector<64x1xf32> to vector<64x128xf32>
    %17 = arith.subf %4, %16 : vector<64x128xf32>
    %18 = math.exp %17 : vector<64x128xf32>
    %cst_8 = arith.constant 0.000000e+00 : f32
    %19 = vector.shape_cast %7 : vector<1x128xi1> to vector<1x128xi1>
    %20 = vector.broadcast %19 : vector<1x128xi1> to vector<64x128xi1>
    %21 = vector.broadcast %cst_8 : f32 to vector<64x128xf32>
    %22 = arith.select %20, %18, %21 : vector<64x128xi1>, vector<64x128xf32>
    %cst_9 = arith.constant dense<0.000000e+00> : vector<64xf32>
    %23 = vector.multi_reduction <add>, %22, %cst_9 [1] : vector<64x128xf32> to vector<64xf32>
    %24 = vector.shape_cast %23 : vector<64xf32> to vector<64x1xf32>
    %25 = tpu.reciprocal %24 {approx = true} : vector<64x1xf32> -> vector<64x1xf32>
    %26 = vector.broadcast %25 : vector<64x1xf32> to vector<64x128xf32>
    %27 = arith.mulf %22, %26 : vector<64x128xf32>
    %28 = vector.broadcast %13 : vector<64x1xf32> to vector<64x128xf32>
    %29 = arith.cmpf oge, %11, %28 : vector<64x128xf32>
    %c128_i32 = arith.constant 128 : i32
    %30 = vector.shape_cast %5 : vector<1x128xi32> to vector<1x128xi32>
    %31 = vector.broadcast %30 : vector<1x128xi32> to vector<64x128xi32>
    %32 = vector.broadcast %c128_i32 : i32 to vector<64x128xi32>
    %33 = arith.select %29, %31, %32 : vector<64x128xi1>, vector<64x128xi32>
    %cst_10 = arith.constant dense<2147483647> : vector<64xi32>
    %34 = vector.multi_reduction <minsi>, %33, %cst_10 [1] : vector<64x128xi32> to vector<64xi32>
    %35 = vector.shape_cast %34 : vector<64xi32> to vector<64x1xi32>
    %36 = arith.truncf %27 : vector<64x128xf32> to vector<64x128xbf16>
    %c0_11 = arith.constant 0 : index
    %c0_12 = arith.constant 0 : index
    %c0_13 = arith.constant 0 : index
    %37 = vector.load %arg4[%c0_11, %c0_12, %c0_13] : memref<1x128x128xbf16, #tpu.memory_space<vmem>>, vector<1x128x128xbf16>
    %38 = vector.shape_cast %37 : vector<1x128x128xbf16> to vector<128x128xbf16>
    %cst_14 = arith.constant dense<0.000000e+00> : vector<64x128xf32>
    %39 = tpu.matmul %36, %38, %cst_14 {dimension_numbers = #tpu.dot_dimension_numbers<[1], [0], [0], [1], [0, 0, 1, 1], [], []>} : vector<64x128xbf16>, vector<128x128xbf16>, vector<64x128xf32> -> vector<64x128xf32>
    %40 = arith.truncf %39 : vector<64x128xf32> to vector<64x128xbf16>
    %c0_15 = arith.constant 0 : index
    %c0_16 = arith.constant 0 : index
    %c0_17 = arith.constant 0 : index
    %41 = vector.load %arg6[%c0_15, %c0_16, %c0_17] : memref<1x64x128xbf16, #tpu.memory_space<vmem>>, vector<1x64x128xbf16>
    %42 = vector.shape_cast %41 : vector<1x64x128xbf16> to vector<64x128xbf16>
    %43 = vector.shape_cast %40 : vector<64x128xbf16> to vector<1x64x128xbf16>
    tpu.vector_store %arg6[%c0_15, %c0_16, %c0_17], %43 {strides = array<i32>} : memref<1x64x128xbf16, #tpu.memory_space<vmem>>, vector<1x64x128xbf16>,
    %44 = vector.shape_cast %35 : vector<64x1xi32> to vector<64x1xi32>
    %45 = vector.broadcast %44 : vector<64x1xi32> to vector<64x8xi32>
    %c0_18 = arith.constant 0 : index
    %c0_19 = arith.constant 0 : index
    %c0_20 = arith.constant 0 : index
    %46 = vector.load %arg7[%c0_18, %c0_19, %c0_20] : memref<1x64x8xi32, #tpu.memory_space<vmem>>, vector<1x64x8xi32>
    %47 = vector.shape_cast %46 : vector<1x64x8xi32> to vector<64x8xi32>
    %48 = vector.shape_cast %45 : vector<64x8xi32> to vector<1x64x8xi32>
    tpu.vector_store %arg7[%c0_18, %c0_19, %c0_20], %48 {strides = array<i32>} : memref<1x64x8xi32, #tpu.memory_space<vmem>>, vector<1x64x8xi32>,
    return
  }
  func.func @transform_0(%arg0: i32, %arg1: i32) -> (i32, i32, i32) {
    %c0_i32 = arith.constant 0 : i32
    %c0_i32_0 = arith.constant 0 : i32
    return %arg0, %arg1, %c0_i32 : i32, i32, i32
  }
  func.func @transform_1(%arg0: i32, %arg1: i32) -> (i32, i32, i32) {
    %c0_i32 = arith.constant 0 : i32
    %c0_i32_0 = arith.constant 0 : i32
    %c0_i32_1 = arith.constant 0 : i32
    return %arg0, %c0_i32, %c0_i32_0 : i32, i32, i32
  }
  func.func @transform_2(%arg0: i32, %arg1: i32) -> (i32, i32, i32) {
    %c0_i32 = arith.constant 0 : i32
    %c0_i32_0 = arith.constant 0 : i32
    %c0_i32_1 = arith.constant 0 : i32
    return %arg0, %c0_i32, %c0_i32_0 : i32, i32, i32
  }
  func.func @transform_3(%arg0: i32, %arg1: i32) -> (i32, i32, i32) {
    %c0_i32 = arith.constant 0 : i32
    %c0_i32_0 = arith.constant 0 : i32
    %c0_i32_1 = arith.constant 0 : i32
    return %arg0, %c0_i32, %c0_i32_0 : i32, i32, i32
  }
  func.func @transform_4(%arg0: i32, %arg1: i32) -> (i32, i32, i32) {
    %c0_i32 = arith.constant 0 : i32
    %c0_i32_0 = arith.constant 0 : i32
    return %arg0, %arg1, %c0_i32 : i32, i32, i32
  }
  func.func @transform_5(%arg0: i32, %arg1: i32) -> (i32, i32, i32) {
    %c0_i32 = arith.constant 0 : i32
    %c0_i32_0 = arith.constant 0 : i32
    return %arg0, %arg1, %c0_i32 : i32, i32, i32
  }
}

</mosaic_0001>

<llo_original>
// kernel: tpu_custom_call.1
$region0: #{tpu_custom_call.1}
  #allocation0 [shape = 'u32[]', space=smem, size = 0x4, offset = 0x4, fixed_abs, tag = 'smem constant byte address 0x4 - core index']
  #allocation1 [shape = 'u32[72,128]{1,0:T(1,128)}', space=vmem, size = 0x9000, scoped, tag = 'internal scratch']
  %s0 = inlined_call_operand.hbm [shape: bf16[2,64,128], index: 0, kind: input, shape index: {}]
  %s1 = inlined_call_operand.hbm [shape: bf16[2,128,128], index: 1, kind: input, shape index: {}]
  %s2 = inlined_call_operand.hbm [shape: bf16[2,128,128], index: 2, kind: input, shape index: {}]
  %s3 = inlined_call_operand.vmem [shape: f32[2,1,128], index: 3, kind: input, shape index: {}]
  %s4 = inlined_call_operand.hbm [shape: bf16[2,64,128], index: 4, kind: output, shape index: {0}]
  %s5 = inlined_call_operand.vmem [shape: s32[2,64,8], index: 5, kind: output, shape index: {1}]
  %6 = xla_tuple %s4, %s5
  %s7 = sld [smem:[#allocation0]]
  $region69: #{tpu_custom_call.1} parent=0
    _
  %s9 = ssub.s32 1, %s7
  %s10 = scalar_select 0, %s9, %s7
  $region1: #{tpu_custom_call.1} parent=0
    #allocation2 [shape = 'u8[32768]{0}', space=vmem, size = 0x8000, scoped, tag = 'input window, operand 0']
    #allocation3 [shape = 's32[2]{0}', space=sflag, size = 0x8, scoped, tag = 'scoped memory for tpu_custom_call.1']
    #allocation4 [shape = 's32[2]{0}', space=sflag, size = 0x8, scoped, tag = 'scoped memory for tpu_custom_call.1']
    #allocation5 [shape = 'u8[65536]{0}', space=vmem, size = 0x10000, scoped, tag = 'input window, operand 1']
    #allocation6 [shape = 's32[2]{0}', space=sflag, size = 0x8, scoped, tag = 'scoped memory for tpu_custom_call.1']
    #allocation7 [shape = 'u8[65536]{0}', space=vmem, size = 0x10000, scoped, tag = 'input window, operand 2']
    #allocation8 [shape = 'u8[32768]{0}', space=vmem, size = 0x8000, scoped, tag = 'output window, operand 0']
    %11 = vsyncpa [#allocation3], 0
    %s12 = scalar_lea.sflag [#allocation3], 1
    %13 = vsyncpa %s12, 0
    %14 = vsyncpa [#allocation6], 0
    %s15 = scalar_lea.sflag [#allocation6], 1
    %16 = vsyncpa %s15, 0
    %17 = vsyncpa [#allocation4], 0
    %s18 = scalar_lea.sflag [#allocation4], 1
    %19 = vsyncpa %s18, 0
    loop: start=0, step=1, limit=4
    $region2: #{tpu_custom_call.1} parent=1 // loop_pre_header
      _
    $region3: #{tpu_custom_call.1} parent=1 // loop_header
      %s21 = sphi 0, %s25
      %p22 = scmp.ge.s32.totalorder %s21, 4
      %s28 = sphi 0, %s40
      %s29 = sphi 0, %s36
      %s30 = sphi 0, %s28
      %s31 = sphi 0, %s29
      %s32 = sphi 0, %s30
      %s33 = sphi 0, %s31
      %s45 = sphi 0, %s47
      %s48 = sphi 0, %s45
      %s49 = sphi 0, %s48
      %s65 = sphi 0, %s49
      %s71 = sphi 0, %s73
      %s74 = sphi 0, %s71
      %s75 = sphi 0, %s74
      %s91 = sphi 0, %s75
      %s97 = sphi 0, %s99
      %s100 = sphi 0, %s97
      %s101 = sphi 0, %s100
      %s117 = sphi 0, %s101
      %s123 = sphi 0, %s125
      %s126 = sphi 0, %s123
      %s127 = sphi 0, %s126
      %s143 = sphi 0, %s127
      %s151 = sphi 0, %s153
      %s154 = sphi 0, %s151
      %s155 = sphi 0, %s154
      %s171 = sphi 0, %s155
      %s179 = sphi 0, %s181
      %s182 = sphi 0, %s179
      %s183 = sphi 0, %s182
      %s199 = sphi 0, %s183
    $region4: #{tpu_custom_call.1} parent=1 // loop_header_branch
      %24 = sbr.rel (%p22) target = $region8
    $region5: #{tpu_custom_call.1} parent=1 // loop_body
      %s26 = ssub.s32 %s21, 1
      %s27 = ssub.s32 %s21, 2
      %s34 = sadd.s32 1, %s29
      %p35 = scmp.ge.s32.totalorder %s34, 1
      %s36 = scalar_select %p35, 0, %s34
      %s37 = sadd.s32 1, %s28
      %s38 = scalar_select %p35, %s37, %s28
      %p39 = scmp.ge.s32.totalorder %s38, 2
      %s40 = scalar_select %p39, 0, %s38
      %s41 = ssub.s32 %s28, %s40
      %s42 = ssub.s32 %s29, %s36
      %s43 = sor.u32 %s41, %s42
      %p44 = scmp.eq.s32.totalorder %s43, 0
      %s46 = sadd.s32 %s45, 1
      %s47 = scalar_select %p44, %s45, %s46
      %p50 = pneg %p44
      %p51 = scmp.eq.s32.totalorder %s21, 1
      %p52 = por %p50, %p51
      %p53 = scmp.ne.s32.totalorder %s45, %s48
      %p54 = scmp.eq.s32.totalorder %s21, 0
      %p55 = por %p53, %p54
      %p56 = scmp.ne.s32.totalorder %s45, %s48
      %p57 = scmp.eq.s32.totalorder %s26, 1
      %p58 = por %p56, %p57
      %p59 = scmp.ne.s32.totalorder %s48, %s49
      %p60 = scmp.eq.s32.totalorder %s26, 0
      %p61 = por %p59, %p60
      %p62 = scmp.ne.s32.totalorder %s48, %s49
      %p63 = scmp.eq.s32.totalorder %s27, 1
      %p64 = por %p62, %p63
      %p66 = scmp.ne.s32.totalorder %s49, %s65
      %p67 = scmp.eq.s32.totalorder %s27, 0
      %p68 = por %p66, %p67
      %s69 = ssub.s32 %s28, %s40
      %p70 = scmp.eq.s32.totalorder %s69, 0
      %s72 = sadd.s32 %s71, 1
      %s73 = scalar_select %p70, %s71, %s72
      %p76 = pneg %p70
      %p77 = scmp.eq.s32.totalorder %s21, 1
      %p78 = por %p76, %p77
      %p79 = scmp.ne.s32.totalorder %s71, %s74
      %p80 = scmp.eq.s32.totalorder %s21, 0
      %p81 = por %p79, %p80
      %p82 = scmp.ne.s32.totalorder %s71, %s74
      %p83 = scmp.eq.s32.totalorder %s26, 1
      %p84 = por %p82, %p83
      %p85 = scmp.ne.s32.totalorder %s74, %s75
      %p86 = scmp.eq.s32.totalorder %s26, 0
      %p87 = por %p85, %p86
      %p88 = scmp.ne.s32.totalorder %s74, %s75
      %p89 = scmp.eq.s32.totalorder %s27, 1
      %p90 = por %p88, %p89
      %p92 = scmp.ne.s32.totalorder %s75, %s91
      %p93 = scmp.eq.s32.totalorder %s27, 0
      %p94 = por %p92, %p93
      %s95 = ssub.s32 %s28, %s40
      %p96 = scmp.eq.s32.totalorder %s95, 0
      %s98 = sadd.s32 %s97, 1
      %s99 = scalar_select %p96, %s97, %s98
      %p102 = pneg %p96
      %p103 = scmp.eq.s32.totalorder %s21, 1
      %p104 = por %p102, %p103
      %p105 = scmp.ne.s32.totalorder %s97, %s100
      %p106 = scmp.eq.s32.totalorder %s21, 0
      %p107 = por %p105, %p106
      %p108 = scmp.ne.s32.totalorder %s97, %s100
      %p109 = scmp.eq.s32.totalorder %s26, 1
      %p110 = por %p108, %p109
      %p111 = scmp.ne.s32.totalorder %s100, %s101
      %p112 = scmp.eq.s32.totalorder %s26, 0
      %p113 = por %p111, %p112
      %p114 = scmp.ne.s32.totalorder %s100, %s101
      %p115 = scmp.eq.s32.totalorder %s27, 1
      %p116 = por %p114, %p115
      %p118 = scmp.ne.s32.totalorder %s101, %s117
      %p119 = scmp.eq.s32.totalorder %s27, 0
      %p120 = por %p118, %p119
      %s121 = ssub.s32 %s28, %s40
      %p122 = scmp.eq.s32.totalorder %s121, 0
      %s124 = sadd.s32 %s123, 1
      %s125 = scalar_select %p122, %s123, %s124
      %p128 = pneg %p122
      %p129 = scmp.eq.s32.totalorder %s21, 1
      %p130 = por %p128, %p129
      %p131 = scmp.ne.s32.totalorder %s123, %s126
      %p132 = scmp.eq.s32.totalorder %s21, 0
      %p133 = por %p131, %p132
      %p134 = scmp.ne.s32.totalorder %s123, %s126
      %p135 = scmp.eq.s32.totalorder %s26, 1
      %p136 = por %p134, %p135
      %p137 = scmp.ne.s32.totalorder %s126, %s127
      %p138 = scmp.eq.s32.totalorder %s26, 0
      %p139 = por %p137, %p138
      %p140 = scmp.ne.s32.totalorder %s126, %s127
      %p141 = scmp.eq.s32.totalorder %s27, 1
      %p142 = por %p140, %p141
      %p144 = scmp.ne.s32.totalorder %s127, %s143
      %p145 = scmp.eq.s32.totalorder %s27, 0
      %p146 = por %p144, %p145
      %s147 = ssub.s32 %s28, %s40
      %s148 = ssub.s32 %s29, %s36
      %s149 = sor.u32 %s147, %s148
      %p150 = scmp.eq.s32.totalorder %s149, 0
      %s152 = sadd.s32 %s151, 1
      %s153 = scalar_select %p150, %s151, %s152
      %p156 = pneg %p150
      %p157 = scmp.eq.s32.totalorder %s21, 1
      %p158 = por %p156, %p157
      %p159 = scmp.ne.s32.totalorder %s151, %s154
      %p160 = scmp.eq.s32.totalorder %s21, 0
      %p161 = por %p159, %p160
      %p162 = scmp.ne.s32.totalorder %s151, %s154
      %p163 = scmp.eq.s32.totalorder %s26, 1
      %p164 = por %p162, %p163
      %p165 = scmp.ne.s32.totalorder %s154, %s155
      %p166 = scmp.eq.s32.totalorder %s26, 0
      %p167 = por %p165, %p166
      %p168 = scmp.ne.s32.totalorder %s154, %s155
      %p169 = scmp.eq.s32.totalorder %s27, 1
      %p170 = por %p168, %p169
      %p172 = scmp.ne.s32.totalorder %s155, %s171
      %p173 = scmp.eq.s32.totalorder %s27, 0
      %p174 = por %p172, %p173
      %s175 = ssub.s32 %s28, %s40
      %s176 = ssub.s32 %s29, %s36
      %s177 = sor.u32 %s175, %s176
      %p178 = scmp.eq.s32.totalorder %s177, 0
      %s180 = sadd.s32 %s179, 1
      %s181 = scalar_select %p178, %s179, %s180
      %p184 = pneg %p178
      %p185 = scmp.eq.s32.totalorder %s21, 1
      %p186 = por %p184, %p185
      %p187 = scmp.ne.s32.totalorder %s179, %s182
      %p188 = scmp.eq.s32.totalorder %s21, 0
      %p189 = por %p187, %p188
      %p190 = scmp.ne.s32.totalorder %s179, %s182
      %p191 = scmp.eq.s32.totalorder %s26, 1
      %p192 = por %p190, %p191
      %p193 = scmp.ne.s32.totalorder %s182, %s183
      %p194 = scmp.eq.s32.totalorder %s26, 0
      %p195 = por %p193, %p194
      %p196 = scmp.ne.s32.totalorder %s182, %s183
      %p197 = scmp.eq.s32.totalorder %s27, 1
      %p198 = por %p196, %p197
      %p200 = scmp.ne.s32.totalorder %s183, %s199
      %p201 = scmp.eq.s32.totalorder %s27, 0
      %p202 = por %p200, %p201
      %p203 = scmp.le.s32.totalorder 1, %s21
      %p204 = scmp.lt.s32.totalorder %s21, 3
      %p205 = pnand %p203, %p204
      %p206 = pneg %p205
      // Predicated region
      $region9: #{tpu_custom_call.1} parent=5 // pred_check
        _
      $region10: #{tpu_custom_call.1} parent=5 // pred_check_branch
        %208 = sbr.rel (%p205) target = $region12
      $region11: #{tpu_custom_call.1} parent=5 // pred_region
        %s209 = ssub.s32 %s21, 1
      $region12: #{tpu_custom_call.1} parent=5 // pred_fallthru
        _
      %p210 = scmp.lt.s32.totalorder %s21, 2
      // Predicated region
      $region13: #{tpu_custom_call.1} parent=5 // pred_check
        %p211 = pneg %p210
      $region14: #{tpu_custom_call.1} parent=5 // pred_check_branch
        %213 = sbr.rel (%p211) target = $region16
      $region15: #{tpu_custom_call.1} parent=5 // pred_region
        // Predicated region
        $region17: #{tpu_custom_call.1} parent=15 // pred_check
          %p214 = pneg %p55
        $region18: #{tpu_custom_call.1} parent=15 // pred_check_branch
          %216 = sbr.rel (%p214) target = $region20
        $region19: #{tpu_custom_call.1} parent=15 // pred_region
          %s217 = sand.u32 %s45, 1
          %s218 = scalar_lea.sflag [#allocation3], %s217
          %s219 = sand.u32 %s45, 1
          %s220 = smul.addr %s219, 32
          %s221 = scalar_lea.vmem [#allocation2], %s220
          %s222 = smul.u32 8, %s29
          %224 = vsyncadd %s218, 0
          %s225 = smul.addr %s28, 8
          %s226 = sadd.s32 %s222, %s225
          %s227 = smul.addr %s226, 4
          %s228 = scalar_lea.hbm %s0, %s227
          %s229 = sshll.u32 %s228, 4
          %s230 = int_to_ptr.hbm [resolvable:$true] %s229
          %s231 = sshll.u32 %s221, 4
          %s232 = int_to_ptr.vmem [resolvable:$true] %s231
          %237 = dma.hbm_to_vmem [thread:$0]  %s230, 512, %s232, %s218, 64, 64, 4
        $region20: #{tpu_custom_call.1} parent=15 // pred_fallthru
          _
        // Predicated region
        $region21: #{tpu_custom_call.1} parent=15 // pred_check
          %p238 = pneg %p81
        $region22: #{tpu_custom_call.1} parent=15 // pred_check_branch
          %240 = sbr.rel (%p238) target = $region24
        $region23: #{tpu_custom_call.1} parent=15 // pred_region
          %s241 = sand.u32 %s21, 1
          %s242 = scalar_lea.sflag [#allocation6], %s241
          %s243 = sand.u32 %s71, 1
          %s244 = smul.addr %s243, 64
          %s245 = scalar_lea.vmem [#allocation5], %s244
          %247 = vsyncadd %s242, 0
          %s248 = smul.addr %s28, 16
          %s249 = smul.addr %s248, 4
          %s250 = scalar_lea.hbm %s1, %s249
          %s251 = sshll.u32 %s250, 4
          %s252 = int_to_ptr.hbm [resolvable:$true] %s251
          %s253 = sshll.u32 %s245, 4
          %s254 = int_to_ptr.vmem [resolvable:$true] %s253
          %259 = dma.hbm_to_vmem [thread:$0]  %s252, 1024, %s254, %s242, 64, 64, 4
        $region24: #{tpu_custom_call.1} parent=15 // pred_fallthru
          _
        // Predicated region
        $region25: #{tpu_custom_call.1} parent=15 // pred_check
          %p260 = pneg %p107
        $region26: #{tpu_custom_call.1} parent=15 // pred_check_branch
          %262 = sbr.rel (%p260) target = $region28
        $region27: #{tpu_custom_call.1} parent=15 // pred_region
          %s263 = sand.u32 %s21, 1
          %s264 = scalar_lea.sflag [#allocation6], %s263
          %s265 = sand.u32 %s97, 1
          %s266 = smul.addr %s265, 64
          %s267 = scalar_lea.vmem [#allocation7], %s266
          %269 = vsyncadd %s264, 0
          %s270 = smul.addr %s28, 16
          %s271 = smul.addr %s270, 4
          %s272 = scalar_lea.hbm %s2, %s271
          %s273 = sshll.u32 %s272, 4
          %s274 = int_to_ptr.hbm [resolvable:$true] %s273
          %s275 = sshll.u32 %s267, 4
          %s276 = int_to_ptr.vmem [resolvable:$true] %s275
          %281 = dma.hbm_to_vmem [thread:$0]  %s274, 1024, %s276, %s264, 64, 64, 4
        $region28: #{tpu_custom_call.1} parent=15 // pred_fallthru
          _
        // Predicated region
        $region29: #{tpu_custom_call.1} parent=15 // pred_check
          %p282 = pneg %p133
        $region30: #{tpu_custom_call.1} parent=15 // pred_check_branch
          %284 = sbr.rel (%p282) target = $region32
        $region31: #{tpu_custom_call.1} parent=15 // pred_region
          %p285 = scmp.lt.s32.totalorder %s28, 1
          %s286 = scalar_select %p285, %s28, 1
          %s287 = scalar_lea.vmem %s3, %s286
        $region32: #{tpu_custom_call.1} parent=15 // pred_fallthru
          _
      $region16: #{tpu_custom_call.1} parent=5 // pred_fallthru
        _
      %p288 = scmp.le.s32.totalorder 1, %s21
      %p289 = scmp.lt.s32.totalorder %s21, 3
      %p290 = pnand %p288, %p289
      %p291 = pneg %p290
      // Predicated region
      $region33: #{tpu_custom_call.1} parent=5 // pred_check
        _
      $region34: #{tpu_custom_call.1} parent=5 // pred_check_branch
        %293 = sbr.rel (%p290) target = $region36
      $region35: #{tpu_custom_call.1} parent=5 // pred_region
        %s294 = ssub.s32 %s21, 1
        %s295 = sand.u32 %s48, 1
        %s296 = scalar_lea.sflag [#allocation3], %s295
        %s297 = sand.u32 %s48, 1
        %s298 = smul.addr %s297, 32
        %s299 = scalar_lea.vmem [#allocation2], %s298
        // Predicated region
        $region37: #{tpu_custom_call.1} parent=35 // pred_check
          %p300 = pneg %p61
        $region38: #{tpu_custom_call.1} parent=35 // pred_check_branch
          %302 = sbr.rel (%p300) target = $region40
        $region39: #{tpu_custom_call.1} parent=35 // pred_region
          %304 = dma.done %s296, 512
        $region40: #{tpu_custom_call.1} parent=35 // pred_fallthru
          _
        %s305 = sand.u32 %s26, 1
        %s306 = scalar_lea.sflag [#allocation6], %s305
        %s307 = sand.u32 %s74, 1
        %s308 = smul.addr %s307, 64
        %s309 = scalar_lea.vmem [#allocation5], %s308
        // Predicated region
        $region41: #{tpu_custom_call.1} parent=35 // pred_check
          %p310 = pneg %p87
        $region42: #{tpu_custom_call.1} parent=35 // pred_check_branch
          %312 = sbr.rel (%p310) target = $region44
        $region43: #{tpu_custom_call.1} parent=35 // pred_region
          %314 = dma.done %s306, 1024
        $region44: #{tpu_custom_call.1} parent=35 // pred_fallthru
          _
        %s315 = sand.u32 %s26, 1
        %s316 = scalar_lea.sflag [#allocation6], %s315
        %s317 = sand.u32 %s100, 1
        %s318 = smul.addr %s317, 64
        %s319 = scalar_lea.vmem [#allocation7], %s318
        // Predicated region
        $region45: #{tpu_custom_call.1} parent=35 // pred_check
          %p320 = pneg %p113
        $region46: #{tpu_custom_call.1} parent=35 // pred_check_branch
          %322 = sbr.rel (%p320) target = $region48
        $region47: #{tpu_custom_call.1} parent=35 // pred_region
          %324 = dma.done %s316, 1024
        $region48: #{tpu_custom_call.1} parent=35 // pred_fallthru
          _
        %s325 = sand.u32 %s48, 1
        %s326 = scalar_lea.sflag [#allocation3], %s325
        %s327 = sand.u32 %s48, 1
        %s328 = smul.addr %s327, 32
        %s329 = scalar_lea.vmem [#allocation2], %s328
        %p330 = pneg %p61
        %p331 = pneg %p58
        %s332 = sand.u32 %s26, 1
        %s333 = scalar_lea.sflag [#allocation6], %s332
        %s334 = sand.u32 %s74, 1
        %s335 = smul.addr %s334, 64
        %s336 = scalar_lea.vmem [#allocation5], %s335
        %p337 = pneg %p87
        %p338 = pneg %p84
        %s339 = sand.u32 %s26, 1
        %s340 = scalar_lea.sflag [#allocation6], %s339
        %s341 = sand.u32 %s100, 1
        %s342 = smul.addr %s341, 64
        %s343 = scalar_lea.vmem [#allocation7], %s342
        %p344 = pneg %p113
        %p345 = pneg %p110
        %p346 = scmp.lt.s32.totalorder %s30, 1
        %s347 = scalar_select %p346, %s30, 1
        %s348 = scalar_lea.vmem %s3, %s347
        %p349 = pneg %p139
        %p350 = pneg %p136
        %p351 = pneg %p167
        %p352 = pneg %p164
        %s353 = sand.u32 %s154, 1
        %s354 = scalar_lea.sflag [#allocation4], %s353
        %s355 = sand.u32 %s154, 1
        %s356 = smul.addr %s355, 32
        %s357 = scalar_lea.vmem [#allocation8], %s356
        %p358 = pneg %p195
        %p359 = pneg %p192
        %s360 = smul.u32 8, %s31
        %p361 = scmp.lt.s32.totalorder %s30, 1
        %s362 = scalar_select %p361, %s30, 1
        %p363 = scmp.lt.s32.totalorder %s360, 7
        %s364 = scalar_select %p363, %s360, 7
        %s365 = smul.addr %s362, 8
        %s366 = sadd.s32 %s364, %s365
        %s367 = smul.addr %s366, 8
        %s368 = scalar_lea.vmem %s5, %s367
        %s369 = smul.u32 8, %s31
        %p370 = scmp.lt.s32.totalorder %s30, 1
        %s371 = scalar_select %p370, %s30, 1
        %s372 = scalar_lea.vmem %s3, %s371
        %s373 = smul.u32 8, %s31
        %s374 = smul.u32 8, %s31
        %p375 = scmp.lt.s32.totalorder %s30, 1
        %s376 = scalar_select %p375, %s30, 1
        %p377 = scmp.lt.s32.totalorder %s374, 7
        %s378 = scalar_select %p377, %s374, 7
        %s379 = smul.addr %s376, 8
        %s380 = sadd.s32 %s378, %s379
        %s381 = smul.addr %s380, 8
        %s382 = scalar_lea.vmem %s5, %s381
        %s383 = smul.u32 8, %s31
        %v384 = vld [vmem:[%s299] sm:$0xf]
        %v385 = vld [vmem:[%s299 + $0x4] sm:$0xf]
        %v386 = vld [vmem:[%s299 + $0x8] sm:$0xf]
        %v387 = vld [vmem:[%s299 + $0xc] sm:$0xf]
        %v388 = vld [vmem:[%s299 + $0x10] sm:$0xf]
        %v389 = vld [vmem:[%s299 + $0x14] sm:$0xf]
        %v390 = vld [vmem:[%s299 + $0x18] sm:$0xf]
        %v391 = vld [vmem:[%s299 + $0x1c] sm:$0xf]
        %v392 = vld [vmem:[%s309] sm:$0xf]
        %v393 = vld [vmem:[%s309 + $0x4] sm:$0xf]
        %v394 = vld [vmem:[%s309 + $0x8] sm:$0xf]
        %v395 = vld [vmem:[%s309 + $0xc] sm:$0xf]
        %v396 = vld [vmem:[%s309 + $0x10] sm:$0xf]
        %v397 = vld [vmem:[%s309 + $0x14] sm:$0xf]
        %v398 = vld [vmem:[%s309 + $0x18] sm:$0xf]
        %v399 = vld [vmem:[%s309 + $0x1c] sm:$0xf]
        %v400 = vld [vmem:[%s309 + $0x20] sm:$0xf]
        %v401 = vld [vmem:[%s309 + $0x24] sm:$0xf]
        %v402 = vld [vmem:[%s309 + $0x28] sm:$0xf]
        %v403 = vld [vmem:[%s309 + $0x2c] sm:$0xf]
        %v404 = vld [vmem:[%s309 + $0x30] sm:$0xf]
        %v405 = vld [vmem:[%s309 + $0x34] sm:$0xf]
        %v406 = vld [vmem:[%s309 + $0x38] sm:$0xf]
        %v407 = vld [vmem:[%s309 + $0x3c] sm:$0xf]
        %v416 = vunpack.c.l.b16 %v384
        %v417 = vunpack.c.l.b16 %v385
        %v418 = vunpack.c.l.b16 %v386
        %v419 = vunpack.c.l.b16 %v387
        %v420 = vunpack.c.l.b16 %v388
        %v421 = vunpack.c.l.b16 %v389
        %v422 = vunpack.c.l.b16 %v390
        %v423 = vunpack.c.l.b16 %v391
        %v424 = vpack.c.b16 %v417, %v416
        %v425 = vpack.c.b16 %v419, %v418
        %v426 = vpack.c.b16 %v421, %v420
        %v427 = vpack.c.b16 %v423, %v422
        %v448 = vunpack.c.l.b16 %v392
        %v449 = vunpack.c.l.b16 %v393
        %v450 = vunpack.c.l.b16 %v394
        %v451 = vunpack.c.l.b16 %v395
        %v452 = vunpack.c.l.b16 %v396
        %v453 = vunpack.c.l.b16 %v397
        %v454 = vunpack.c.l.b16 %v398
        %v455 = vunpack.c.l.b16 %v399
        %v456 = vunpack.c.l.b16 %v400
        %v457 = vunpack.c.l.b16 %v401
        %v458 = vunpack.c.l.b16 %v402
        %v459 = vunpack.c.l.b16 %v403
        %v460 = vunpack.c.l.b16 %v404
        %v461 = vunpack.c.l.b16 %v405
        %v462 = vunpack.c.l.b16 %v406
        %v463 = vunpack.c.l.b16 %v407
        %v464 = vpack.c.b16 %v449, %v448
        %v465 = vpack.c.b16 %v451, %v450
        %v466 = vpack.c.b16 %v453, %v452
        %v467 = vpack.c.b16 %v455, %v454
        %v468 = vpack.c.b16 %v457, %v456
        %v469 = vpack.c.b16 %v459, %v458
        %v470 = vpack.c.b16 %v461, %v460
        %v471 = vpack.c.b16 %v463, %v462
        %480 = vmatpush.bf16.msra.mxu0 %v471
        %481 = vmatpush.bf16.msra.mxu0 %v470
        %482 = vmatpush.bf16.msra.mxu0 %v469
        %483 = vmatpush.bf16.msra.mxu0 %v468
        %484 = vmatpush.bf16.msra.mxu0 %v467
        %485 = vmatpush.bf16.msra.mxu0 %v466
        %486 = vmatpush.bf16.msra.mxu0 %v465
        %487 = vmatpush.bf16.msra.mxu0 %v464
        %488 = vmatmul.bf16.gmra.mxu0 %v424
        %v489 = vpop.f32.mrf.mxu0
        %v490 = vadd.f32 0.0, %v489
        %v491 = vpop.f32.mrf.mxu0
        %v492 = vadd.f32 0.0, %v491
        %493 = vmatmul.bf16.gmra.mxu0 %v425
        %v494 = vpop.f32.mrf.mxu0
        %v495 = vadd.f32 0.0, %v494
        %v496 = vpop.f32.mrf.mxu0
        %v497 = vadd.f32 0.0, %v496
        %498 = vmatmul.bf16.gmra.mxu0 %v426
        %v499 = vpop.f32.mrf.mxu0
        %v500 = vadd.f32 0.0, %v499
        %v501 = vpop.f32.mrf.mxu0
        %v502 = vadd.f32 0.0, %v501
        %503 = vmatmul.bf16.gmra.mxu0 %v427
        %v504 = vpop.f32.mrf.mxu0
        %v505 = vadd.f32 0.0, %v504
        %v506 = vpop.f32.mrf.mxu0
        %v507 = vadd.f32 0.0, %v506
        %508 = vdwg.mxu0
        %v509 = vlaneseq
        %v510 = vand.u32 %v509, 127
        %vm511 = vcmp.lt.s32.totalorder %v510, 64
        %v512 = vsel %vm511, 1, 0
        %vm513 = vcmp.eq.s32.totalorder %v512, 1
        %v514 = vsel %vm513, %v490, -1e+30
        %v515 = vsel %vm513, %v492, -1e+30
        %v516 = vsel %vm513, %v495, -1e+30
        %v517 = vsel %vm513, %v497, -1e+30
        %v518 = vsel %vm513, %v500, -1e+30
        %v519 = vsel %vm513, %v502, -1e+30
        %v520 = vsel %vm513, %v505, -1e+30
        %v521 = vsel %vm513, %v507, -1e+30
        %522 = vmax.xlane.f32.xlu0 %v514
        %v523 = vpop.xlane.xlu0 %522
        %524 = vmax.xlane.f32.xlu0 %v515
        %v525 = vpop.xlane.xlu0 %524
        %526 = vmax.xlane.f32.xlu0 %v516
        %v527 = vpop.xlane.xlu0 %526
        %528 = vmax.xlane.f32.xlu0 %v517
        %v529 = vpop.xlane.xlu0 %528
        %530 = vmax.xlane.f32.xlu0 %v518
        %v531 = vpop.xlane.xlu0 %530
        %532 = vmax.xlane.f32.xlu0 %v519
        %v533 = vpop.xlane.xlu0 %532
        %534 = vmax.xlane.f32.xlu0 %v520
        %v535 = vpop.xlane.xlu0 %534
        %536 = vmax.xlane.f32.xlu0 %v521
        %v537 = vpop.xlane.xlu0 %536
        %v538 = vmax.f32 %v523, 0.0
        %v539 = vmax.f32 %v525, 0.0
        %v540 = vmax.f32 %v527, 0.0
        %v541 = vmax.f32 %v529, 0.0
        %v542 = vmax.f32 %v531, 0.0
        %v543 = vmax.f32 %v533, 0.0
        %v544 = vmax.f32 %v535, 0.0
        %v545 = vmax.f32 %v537, 0.0
        %v546 = vsub.f32 %v490, %v538
        %v547 = vsub.f32 %v492, %v539
        %v548 = vsub.f32 %v495, %v540
        %v549 = vsub.f32 %v497, %v541
        %v550 = vsub.f32 %v500, %v542
        %v551 = vsub.f32 %v502, %v543
        %v552 = vsub.f32 %v505, %v544
        %v553 = vsub.f32 %v507, %v545
        %v554 = vmul.f32 %v546, 1.442695
        %v555 = vpow.pop %v554
        %v556 = vmul.f32 %v547, 1.442695
        %v557 = vpow.pop %v556
        %v558 = vmul.f32 %v548, 1.442695
        %v559 = vpow.pop %v558
        %v560 = vmul.f32 %v549, 1.442695
        %v561 = vpow.pop %v560
        %v562 = vmul.f32 %v550, 1.442695
        %v563 = vpow.pop %v562
        %v564 = vmul.f32 %v551, 1.442695
        %v565 = vpow.pop %v564
        %v566 = vmul.f32 %v552, 1.442695
        %v567 = vpow.pop %v566
        %v568 = vmul.f32 %v553, 1.442695
        %v569 = vpow.pop %v568
        %v570 = vsel %vm513, %v555, 0.0
        %v571 = vsel %vm513, %v557, 0.0
        %v572 = vsel %vm513, %v559, 0.0
        %v573 = vsel %vm513, %v561, 0.0
        %v574 = vsel %vm513, %v563, 0.0
        %v575 = vsel %vm513, %v565, 0.0
        %v576 = vsel %vm513, %v567, 0.0
        %v577 = vsel %vm513, %v569, 0.0
        %578 = vadd.xlane.f32.xlu0 %v570
        %v579 = vpop.xlane.xlu0 %578
        %580 = vadd.xlane.f32.xlu0 %v571
        %v581 = vpop.xlane.xlu0 %580
        %582 = vadd.xlane.f32.xlu0 %v572
        %v583 = vpop.xlane.xlu0 %582
        %584 = vadd.xlane.f32.xlu0 %v573
        %v585 = vpop.xlane.xlu0 %584
        %586 = vadd.xlane.f32.xlu0 %v574
        %v587 = vpop.xlane.xlu0 %586
        %588 = vadd.xlane.f32.xlu0 %v575
        %v589 = vpop.xlane.xlu0 %588
        %590 = vadd.xlane.f32.xlu0 %v576
        %v591 = vpop.xlane.xlu0 %590
        %592 = vadd.xlane.f32.xlu0 %v577
        %v593 = vpop.xlane.xlu0 %592
        %v594 = vrcp.pop %v579
        %v595 = vrcp.pop %v581
        %v596 = vrcp.pop %v583
        %v597 = vrcp.pop %v585
        %v598 = vrcp.pop %v587
        %v599 = vrcp.pop %v589
        %v600 = vrcp.pop %v591
        %v601 = vrcp.pop %v593
        %v602 = vmul.f32 %v570, %v594
        %v603 = vmul.f32 %v571, %v595
        %v604 = vmul.f32 %v572, %v596
        %v605 = vmul.f32 %v573, %v597
        %v606 = vmul.f32 %v574, %v598
        %v607 = vmul.f32 %v575, %v599
        %v608 = vmul.f32 %v576, %v600
        %v609 = vmul.f32 %v577, %v601
        %vm610 = vcmp.ge.f32.partialorder %v514, %v523
        %vm611 = vcmp.ge.f32.partialorder %v515, %v525
        %vm612 = vcmp.ge.f32.partialorder %v516, %v527
        %vm613 = vcmp.ge.f32.partialorder %v517, %v529
        %vm614 = vcmp.ge.f32.partialorder %v518, %v531
        %vm615 = vcmp.ge.f32.partialorder %v519, %v533
        %vm616 = vcmp.ge.f32.partialorder %v520, %v535
        %vm617 = vcmp.ge.f32.partialorder %v521, %v537
        %v618 = vsel %vm610, %v510, 128
        %v619 = vsel %vm611, %v510, 128
        %v620 = vsel %vm612, %v510, 128
        %v621 = vsel %vm613, %v510, 128
        %v622 = vsel %vm614, %v510, 128
        %v623 = vsel %vm615, %v510, 128
        %v624 = vsel %vm616, %v510, 128
        %v625 = vsel %vm617, %v510, 128
        %v626 = vand.u32 %v618, 65535
        %v627 = vshra.s32 %v618, 16
        %v628 = vcvt.s32.f32 %v626
        %v629 = vcvt.s32.f32 %v627
        %630 = vmin.xlane.f32.xlu0 %v629
        %v631 = vpop.xlane.xlu0 %630
        %vm632 = vcmp.eq.f32.partialorder %v629, %v631
        %v633 = vsel %vm632, %v628, inf
        %634 = vmin.xlane.f32.xlu0 %v633
        %v635 = vpop.xlane.xlu0 %634
        %v636 = vcvt.f32.s32 %v635
        %v637 = vcvt.f32.s32 %v631
        %v638 = vshll.u32 %v637, 16
        %v639 = vadd.s32 %v638, %v636
        %v640 = vand.u32 %v619, 65535
        %v641 = vshra.s32 %v619, 16
        %v642 = vcvt.s32.f32 %v640
        %v643 = vcvt.s32.f32 %v641
        %644 = vmin.xlane.f32.xlu0 %v643
        %v645 = vpop.xlane.xlu0 %644
        %vm646 = vcmp.eq.f32.partialorder %v643, %v645
        %v647 = vsel %vm646, %v642, inf
        %648 = vmin.xlane.f32.xlu0 %v647
        %v649 = vpop.xlane.xlu0 %648
        %v650 = vcvt.f32.s32 %v649
        %v651 = vcvt.f32.s32 %v645
        %v652 = vshll.u32 %v651, 16
        %v653 = vadd.s32 %v652, %v650
        %v654 = vand.u32 %v620, 65535
        %v655 = vshra.s32 %v620, 16
        %v656 = vcvt.s32.f32 %v654
        %v657 = vcvt.s32.f32 %v655
        %658 = vmin.xlane.f32.xlu0 %v657
        %v659 = vpop.xlane.xlu0 %658
        %vm660 = vcmp.eq.f32.partialorder %v657, %v659
        %v661 = vsel %vm660, %v656, inf
        %662 = vmin.xlane.f32.xlu0 %v661
        %v663 = vpop.xlane.xlu0 %662
        %v664 = vcvt.f32.s32 %v663
        %v665 = vcvt.f32.s32 %v659
        %v666 = vshll.u32 %v665, 16
        %v667 = vadd.s32 %v666, %v664
        %v668 = vand.u32 %v621, 65535
        %v669 = vshra.s32 %v621, 16
        %v670 = vcvt.s32.f32 %v668
        %v671 = vcvt.s32.f32 %v669
        %672 = vmin.xlane.f32.xlu0 %v671
        %v673 = vpop.xlane.xlu0 %672
        %vm674 = vcmp.eq.f32.partialorder %v671, %v673
        %v675 = vsel %vm674, %v670, inf
        %676 = vmin.xlane.f32.xlu0 %v675
        %v677 = vpop.xlane.xlu0 %676
        %v678 = vcvt.f32.s32 %v677
        %v679 = vcvt.f32.s32 %v673
        %v680 = vshll.u32 %v679, 16
        %v681 = vadd.s32 %v680, %v678
        %v682 = vand.u32 %v622, 65535
        %v683 = vshra.s32 %v622, 16
        %v684 = vcvt.s32.f32 %v682
        %v685 = vcvt.s32.f32 %v683
        %686 = vmin.xlane.f32.xlu0 %v685
        %v687 = vpop.xlane.xlu0 %686
        %vm688 = vcmp.eq.f32.partialorder %v685, %v687
        %v689 = vsel %vm688, %v684, inf
        %690 = vmin.xlane.f32.xlu0 %v689
        %v691 = vpop.xlane.xlu0 %690
        %v692 = vcvt.f32.s32 %v691
        %v693 = vcvt.f32.s32 %v687
        %v694 = vshll.u32 %v693, 16
        %v695 = vadd.s32 %v694, %v692
        %v696 = vand.u32 %v623, 65535
        %v697 = vshra.s32 %v623, 16
        %v698 = vcvt.s32.f32 %v696
        %v699 = vcvt.s32.f32 %v697
        %700 = vmin.xlane.f32.xlu0 %v699
        %v701 = vpop.xlane.xlu0 %700
        %vm702 = vcmp.eq.f32.partialorder %v699, %v701
        %v703 = vsel %vm702, %v698, inf
        %704 = vmin.xlane.f32.xlu0 %v703
        %v705 = vpop.xlane.xlu0 %704
        %v706 = vcvt.f32.s32 %v705
        %v707 = vcvt.f32.s32 %v701
        %v708 = vshll.u32 %v707, 16
        %v709 = vadd.s32 %v708, %v706
        %v710 = vand.u32 %v624, 65535
        %v711 = vshra.s32 %v624, 16
        %v712 = vcvt.s32.f32 %v710
        %v713 = vcvt.s32.f32 %v711
        %714 = vmin.xlane.f32.xlu0 %v713
        %v715 = vpop.xlane.xlu0 %714
        %vm716 = vcmp.eq.f32.partialorder %v713, %v715
        %v717 = vsel %vm716, %v712, inf
        %718 = vmin.xlane.f32.xlu0 %v717
        %v719 = vpop.xlane.xlu0 %718
        %v720 = vcvt.f32.s32 %v719
        %v721 = vcvt.f32.s32 %v715
        %v722 = vshll.u32 %v721, 16
        %v723 = vadd.s32 %v722, %v720
        %v724 = vand.u32 %v625, 65535
        %v725 = vshra.s32 %v625, 16
        %v726 = vcvt.s32.f32 %v724
        %v727 = vcvt.s32.f32 %v725
        %728 = vmin.xlane.f32.xlu0 %v727
        %v729 = vpop.xlane.xlu0 %728
        %vm730 = vcmp.eq.f32.partialorder %v727, %v729
        %v731 = vsel %vm730, %v726, inf
        %732 = vmin.xlane.f32.xlu0 %v731
        %v733 = vpop.xlane.xlu0 %732
        %v734 = vcvt.f32.s32 %v733
        %v735 = vcvt.f32.s32 %v729
        %v736 = vshll.u32 %v735, 16
        %v737 = vadd.s32 %v736, %v734
        %v738 = vpack.c.bf16 %v603, %v602
        %v739 = vpack.c.bf16 %v605, %v604
        %v740 = vpack.c.bf16 %v607, %v606
        %v741 = vpack.c.bf16 %v609, %v608
        %v742 = vld [vmem:[%s319] sm:$0xf]
        %v743 = vld [vmem:[%s319 + $0x4] sm:$0xf]
        %v744 = vld [vmem:[%s319 + $0x8] sm:$0xf]
        %v745 = vld [vmem:[%s319 + $0xc] sm:$0xf]
        %v746 = vld [vmem:[%s319 + $0x10] sm:$0xf]
        %v747 = vld [vmem:[%s319 + $0x14] sm:$0xf]
        %v748 = vld [vmem:[%s319 + $0x18] sm:$0xf]
        %v749 = vld [vmem:[%s319 + $0x1c] sm:$0xf]
        %v750 = vld [vmem:[%s319 + $0x20] sm:$0xf]
        %v751 = vld [vmem:[%s319 + $0x24] sm:$0xf]
        %v752 = vld [vmem:[%s319 + $0x28] sm:$0xf]
        %v753 = vld [vmem:[%s319 + $0x2c] sm:$0xf]
        %v754 = vld [vmem:[%s319 + $0x30] sm:$0xf]
        %v755 = vld [vmem:[%s319 + $0x34] sm:$0xf]
        %v756 = vld [vmem:[%s319 + $0x38] sm:$0xf]
        %v757 = vld [vmem:[%s319 + $0x3c] sm:$0xf]
        %v774 = vunpack.c.l.b16 %v742
        %v775 = vunpack.c.l.b16 %v743
        %v776 = vunpack.c.l.b16 %v744
        %v777 = vunpack.c.l.b16 %v745
        %v778 = vunpack.c.l.b16 %v746
        %v779 = vunpack.c.l.b16 %v747
        %v780 = vunpack.c.l.b16 %v748
        %v781 = vunpack.c.l.b16 %v749
        %v782 = vunpack.c.l.b16 %v750
        %v783 = vunpack.c.l.b16 %v751
        %v784 = vunpack.c.l.b16 %v752
        %v785 = vunpack.c.l.b16 %v753
        %v786 = vunpack.c.l.b16 %v754
        %v787 = vunpack.c.l.b16 %v755
        %v788 = vunpack.c.l.b16 %v756
        %v789 = vunpack.c.l.b16 %v757
        %v790 = vpack.c.b16 %v775, %v774
        %v791 = vpack.c.b16 %v777, %v776
        %v792 = vpack.c.b16 %v779, %v778
        %v793 = vpack.c.b16 %v781, %v780
        %v794 = vpack.c.b16 %v783, %v782
        %v795 = vpack.c.b16 %v785, %v784
        %v796 = vpack.c.b16 %v787, %v786
        %v797 = vpack.c.b16 %v789, %v788
        %806 = vmatpush.bf16.msra.mxu0 %v797
        %807 = vmatpush.bf16.msra.mxu0 %v796
        %808 = vmatpush.bf16.msra.mxu0 %v795
        %809 = vmatpush.bf16.msra.mxu0 %v794
        %810 = vmatpush.bf16.msra.mxu0 %v793
        %811 = vmatpush.bf16.msra.mxu0 %v792
        %812 = vmatpush.bf16.msra.mxu0 %v791
        %813 = vmatpush.bf16.msra.mxu0 %v790
        %814 = vmatmul.bf16.gmra.mxu0 %v738
        %v815 = vpop.f32.mrf.mxu0
        %v816 = vadd.f32 0.0, %v815
        %v817 = vpop.f32.mrf.mxu0
        %v818 = vadd.f32 0.0, %v817
        %819 = vmatmul.bf16.gmra.mxu0 %v739
        %v820 = vpop.f32.mrf.mxu0
        %v821 = vadd.f32 0.0, %v820
        %v822 = vpop.f32.mrf.mxu0
        %v823 = vadd.f32 0.0, %v822
        %824 = vmatmul.bf16.gmra.mxu0 %v740
        %v825 = vpop.f32.mrf.mxu0
        %v826 = vadd.f32 0.0, %v825
        %v827 = vpop.f32.mrf.mxu0
        %v828 = vadd.f32 0.0, %v827
        %829 = vmatmul.bf16.gmra.mxu0 %v741
        %v830 = vpop.f32.mrf.mxu0
        %v831 = vadd.f32 0.0, %v830
        %v832 = vpop.f32.mrf.mxu0
        %v833 = vadd.f32 0.0, %v832
        %834 = vdwg.mxu0
        %v835 = vpack.c.bf16 %v816, %v816
        %v836 = vpack.c.bf16 %v818, %v818
        %v837 = vpack.c.bf16 %v821, %v821
        %v838 = vpack.c.bf16 %v823, %v823
        %v839 = vpack.c.bf16 %v826, %v826
        %v840 = vpack.c.bf16 %v828, %v828
        %v841 = vpack.c.bf16 %v831, %v831
        %v842 = vpack.c.bf16 %v833, %v833
        %843 = vst [vmem:[%s357] sm:$0xf] %v835
        %844 = vst [vmem:[%s357 + $0x4] sm:$0xf] %v836
        %845 = vst [vmem:[%s357 + $0x8] sm:$0xf] %v837
        %846 = vst [vmem:[%s357 + $0xc] sm:$0xf] %v838
        %847 = vst [vmem:[%s357 + $0x10] sm:$0xf] %v839
        %848 = vst [vmem:[%s357 + $0x14] sm:$0xf] %v840
        %849 = vst [vmem:[%s357 + $0x18] sm:$0xf] %v841
        %850 = vst [vmem:[%s357 + $0x1c] sm:$0xf] %v842
        %vm851 = vcmask 64512
        %852 = vst.msk [vmem:[%s382] sm:$0xff] %vm851, %v639
        %853 = vst.msk [vmem:[%s382 + $0x8] sm:$0xff] %vm851, %v653
        %854 = vst.msk [vmem:[%s382 + $0x10] sm:$0xff] %vm851, %v667
        %855 = vst.msk [vmem:[%s382 + $0x18] sm:$0xff] %vm851, %v681
        %856 = vst.msk [vmem:[%s382 + $0x20] sm:$0xff] %vm851, %v695
        %857 = vst.msk [vmem:[%s382 + $0x28] sm:$0xff] %vm851, %v709
        %858 = vst.msk [vmem:[%s382 + $0x30] sm:$0xff] %vm851, %v723
        %859 = vst.msk [vmem:[%s382 + $0x38] sm:$0xff] %vm851, %v737
        %s860 = sand.u32 %s154, 1
        %s861 = scalar_lea.sflag [#allocation4], %s860
        %s862 = sand.u32 %s154, 1
        %s863 = smul.addr %s862, 32
        %s864 = scalar_lea.vmem [#allocation8], %s863
        %s865 = smul.u32 8, %s31
        %p866 = scmp.lt.s32.totalorder %s30, 1
        %s867 = scalar_select %p866, %s30, 1
        %p868 = scmp.lt.s32.totalorder %s865, 7
        %s869 = scalar_select %p868, %s865, 7
        %s870 = smul.addr %s867, 8
        %s871 = sadd.s32 %s869, %s870
        %s872 = smul.addr %s871, 8
        %s873 = scalar_lea.vmem %s5, %s872
        // Predicated region
        $region49: #{tpu_custom_call.1} parent=35 // pred_check
          %p874 = pneg %p164
        $region50: #{tpu_custom_call.1} parent=35 // pred_check_branch
          %876 = sbr.rel (%p874) target = $region52
        $region51: #{tpu_custom_call.1} parent=35 // pred_region
          %s877 = smul.u32 8, %s31
          %879 = vsyncadd %s861, 0
          %s880 = smul.addr %s30, 8
          %s881 = sadd.s32 %s877, %s880
          %s882 = smul.addr %s881, 4
          %s883 = scalar_lea.hbm %s4, %s882
          %s884 = sshll.u32 %s864, 4
          %s885 = int_to_ptr.vmem [resolvable:$true] %s884
          %s886 = sshll.u32 %s883, 4
          %s887 = int_to_ptr.hbm [resolvable:$true] %s886
          %892 = dma.vmem_to_hbm [thread:$0]  %s885, 512, %s887, %s861, 64, 64, 4
        $region52: #{tpu_custom_call.1} parent=35 // pred_fallthru
          _
        // Predicated region
        $region53: #{tpu_custom_call.1} parent=35 // pred_check
          %p893 = pneg %p192
        $region54: #{tpu_custom_call.1} parent=35 // pred_check_branch
          %895 = sbr.rel (%p893) target = $region56
        $region55: #{tpu_custom_call.1} parent=35 // pred_region
          %s896 = smul.u32 8, %s31
        $region56: #{tpu_custom_call.1} parent=35 // pred_fallthru
          _
      $region36: #{tpu_custom_call.1} parent=5 // pred_fallthru
        _
      %p897 = scmp.le.s32.totalorder 2, %s21
      // Predicated region
      $region57: #{tpu_custom_call.1} parent=5 // pred_check
        %p898 = pneg %p897
      $region58: #{tpu_custom_call.1} parent=5 // pred_check_branch
        %900 = sbr.rel (%p898) target = $region60
      $region59: #{tpu_custom_call.1} parent=5 // pred_region
        %s901 = ssub.s32 %s21, 2
        // Predicated region
        $region61: #{tpu_custom_call.1} parent=59 // pred_check
          %p902 = pneg %p170
        $region62: #{tpu_custom_call.1} parent=59 // pred_check_branch
          %904 = sbr.rel (%p902) target = $region64
        $region63: #{tpu_custom_call.1} parent=59 // pred_region
          %s905 = sand.u32 %s155, 1
          %s906 = scalar_lea.sflag [#allocation4], %s905
          %s907 = sand.u32 %s155, 1
          %s908 = smul.addr %s907, 32
          %s909 = scalar_lea.vmem [#allocation8], %s908
          %911 = dma.done %s906, 512
        $region64: #{tpu_custom_call.1} parent=59 // pred_fallthru
          _
        // Predicated region
        $region65: #{tpu_custom_call.1} parent=59 // pred_check
          %p912 = pneg %p198
        $region66: #{tpu_custom_call.1} parent=59 // pred_check_branch
          %914 = sbr.rel (%p912) target = $region68
        $region67: #{tpu_custom_call.1} parent=59 // pred_region
          %s915 = smul.u32 8, %s33
          %p916 = scmp.lt.s32.totalorder %s32, 1
          %s917 = scalar_select %p916, %s32, 1
          %p918 = scmp.lt.s32.totalorder %s915, 7
          %s919 = scalar_select %p918, %s915, 7
          %s920 = smul.addr %s917, 8
          %s921 = sadd.s32 %s919, %s920
          %s922 = smul.addr %s921, 8
          %s923 = scalar_lea.vmem %s5, %s922
        $region68: #{tpu_custom_call.1} parent=59 // pred_fallthru
          _
      $region60: #{tpu_custom_call.1} parent=5 // pred_fallthru
        _
    $region6: #{tpu_custom_call.1} parent=1 // loop_footer
      %s25 = sadd.s32 1, %s21
    $region7: #{tpu_custom_call.1} parent=1 // loop_footer_branch
      %20 = sbr.rel target = $region3
    $region8: #{tpu_custom_call.1} parent=1 // loop_exit
      _
    %924 = vsyncpa [#allocation3], 1
    %s925 = scalar_lea.sflag [#allocation3], 1
    %926 = vsyncpa %s925, 1
    %927 = vsyncpa [#allocation6], 1
    %s928 = scalar_lea.sflag [#allocation6], 1
    %929 = vsyncpa %s928, 1
    %930 = vsyncpa [#allocation4], 1
    %s931 = scalar_lea.sflag [#allocation4], 1
    %932 = vsyncpa %s931, 1

</llo_original>
